<compile_context>
chip_gen: v7x
topology: tpu7x:2x2x1
jax: 0.10.0
libtpu: 0.0.40
codegen_flags: <defaults>
</compile_context>

<pallas_src>
import jax
import jax.numpy as jnp
from jax.experimental import pallas as pl
from jax.experimental.pallas import tpu as pltpu


def _spatial_attention_kernel(x_ref, w1_ref, b1_ref, w2_ref, b2_ref, o_ref):
    # Per grid step (one batch element):
    #   x:  (1, C, N)   f32    N = H*W on the lane axis
    #   w1: (C//2, C)   bf16   conv1 weight, (Cout, Cin)
    #   b1: (C//2, 1)   f32
    #   w2: (C//2, 1)   f32    conv2 weight (Cout == 1)
    #   b2: (1, 1)      f32
    #   o:  (1, 1, N)   f32
    x = x_ref[0].astype(jnp.bfloat16)                                    # (C, N)
    # conv1 (1x1) == channel-mixing matmul on the MXU, f32 accumulation.
    h = jnp.dot(w1_ref[...], x, preferred_element_type=jnp.float32)     # (C//2, N)
    h = jnp.maximum(h + b1_ref[...], 0.0)                               # bias + ReLU
    # conv2 (1x1, Cout == 1): VPU multiply + sublane reduction, f32.
    a = jnp.sum(h * w2_ref[...], axis=0, keepdims=True) + b2_ref[...]   # (1, N)
    o_ref[0] = jax.nn.sigmoid(a)                                        # EUP


def spatial_attention(x_nchw, conv1_w, conv1_b, conv2_w, conv2_b):
    """Fused SpatialAttention forward.

    x_nchw:  (B, C, H, W) float array (NCHW, like the PyTorch module).
    conv1_w: (C//2, C, 1, 1), conv1_b: (C//2,)   -- nn.Conv2d(C, C//2, 1)
    conv2_w: (1, C//2, 1, 1), conv2_b: (1,)      -- nn.Conv2d(C//2, 1, 1)
    returns: (B, 1, H, W) attention weights in [0, 1].
    """
    B, C, H, W = x_nchw.shape
    Ch = C // 2
    N = H * W

    x3 = jnp.asarray(x_nchw, jnp.float32).reshape(B, C, N)          # free reshape (no transpose)
    w1 = jnp.asarray(conv1_w, jnp.float32).reshape(Ch, C).astype(jnp.bfloat16)
    b1 = jnp.asarray(conv1_b, jnp.float32).reshape(Ch, 1)
    w2 = jnp.asarray(conv2_w, jnp.float32).reshape(Ch, 1)
    b2 = jnp.asarray(conv2_b, jnp.float32).reshape(1, 1)

    out = pl.pallas_call(
        _spatial_attention_kernel,
        out_shape=jax.ShapeDtypeStruct((B, 1, N), jnp.float32),
        grid=(B,),
        in_specs=[
            pl.BlockSpec((1, C, N), lambda b: (b, 0, 0)),   # one batch element per step
            pl.BlockSpec((Ch, C), lambda b: (0, 0)),        # weights resident across grid
            pl.BlockSpec((Ch, 1), lambda b: (0, 0)),
            pl.BlockSpec((Ch, 1), lambda b: (0, 0)),
            pl.BlockSpec((1, 1), lambda b: (0, 0)),
        ],
        out_specs=pl.BlockSpec((1, 1, N), lambda b: (b, 0, 0)),
        compiler_params=pltpu.CompilerParams(
            dimension_semantics=("parallel",)),
    )(x3, w1, b1, w2, b2)

    return out.reshape(B, 1, H, W)


if __name__ == "__main__":
    key = jax.random.PRNGKey(0)
    kx, k1, k2, k3, k4 = jax.random.split(key, 5)

    # Shapes the module implies: (batch, channels, 11, 11).
    B, C, H, W = 2, 32, 11, 11
    x = jax.random.normal(kx, (B, C, H, W), jnp.float32)

    # PyTorch-layout Conv2d weights: (Cout, Cin, 1, 1) + (Cout,) biases.
    conv1_w = jax.random.normal(k1, (C // 2, C, 1, 1), jnp.float32) * (2.0 / C) ** 0.5
    conv1_b = jax.random.normal(k2, (C // 2,), jnp.float32) * 0.01
    conv2_w = jax.random.normal(k3, (1, C // 2, 1, 1), jnp.float32) * (2.0 / (C // 2)) ** 0.5
    conv2_b = jax.random.normal(k4, (1,), jnp.float32) * 0.01

    attn = spatial_attention(x, conv1_w, conv1_b, conv2_w, conv2_b)
    jax.block_until_ready(attn)

    # Pure-JAX f32 reference of the same math (1x1 convs == channel matmuls).
    w1m = conv1_w.reshape(C // 2, C)
    w2m = conv2_w.reshape(1, C // 2)
    h_ref = jnp.maximum(
        jnp.einsum("oc,bchw->bohw", w1m, x) + conv1_b.reshape(1, -1, 1, 1), 0.0)
    ref = jax.nn.sigmoid(
        jnp.einsum("oc,bchw->bohw", w2m, h_ref) + conv2_b.reshape(1, 1, 1, 1))

    assert attn.shape == (B, 1, H, W), attn.shape
    assert bool(jnp.all(jnp.isfinite(attn)))
    assert bool(jnp.all((attn >= 0.0) & (attn <= 1.0)))        # sigmoid range
    assert bool(jnp.allclose(attn, ref, atol=2e-2, rtol=2e-2)), \
        float(jnp.max(jnp.abs(attn - ref)))

    print("KERNEL_OK")
</pallas_src>

<mosaic_0001>
module attributes {stable_mosaic.version = 11 : i64} {
  func.func @_spatial_attention_kernel(%arg0: i32, %arg1: memref<1x32x121xf32, #tpu.memory_space<vmem>>, %arg2: memref<16x32xbf16, #tpu.memory_space<vmem>>, %arg3: memref<16x1xf32, #tpu.memory_space<vmem>>, %arg4: memref<16x1xf32, #tpu.memory_space<vmem>>, %arg5: memref<1x1xf32, #tpu.memory_space<vmem>>, %arg6: memref<1x1x121xf32, #tpu.memory_space<vmem>>) attributes {dimension_semantics = [#tpu.dimension_semantics<parallel>], iteration_bounds = array<i64: 2>, scalar_prefetch = 0 : i64, scratch_operands = 0 : i64, tpu.core_type = #tpu.core_type<tc>, window_params = [{transform_indices = @transform_0, window_bounds = array<i64: 1, 32, 121>}, {pipeline_mode = #tpu.pipeline_mode<synchronous>, transform_indices = @transform_1, window_bounds = array<i64: 16, 32>}, {pipeline_mode = #tpu.pipeline_mode<synchronous>, transform_indices = @transform_2, window_bounds = array<i64: 16, 1>}, {pipeline_mode = #tpu.pipeline_mode<synchronous>, transform_indices = @transform_3, window_bounds = array<i64: 16, 1>}, {pipeline_mode = #tpu.pipeline_mode<synchronous>, transform_indices = @transform_4, window_bounds = array<i64: 1, 1>}, {transform_indices = @transform_5, window_bounds = array<i64: 1, 1, 121>}]} {
    %c0 = arith.constant 0 : index
    %c0_0 = arith.constant 0 : index
    %c0_1 = arith.constant 0 : index
    %0 = vector.load %arg1[%c0, %c0_0, %c0_1] : memref<1x32x121xf32, #tpu.memory_space<vmem>>, vector<1x32x121xf32>
    %1 = vector.shape_cast %0 : vector<1x32x121xf32> to vector<32x121xf32>
    %2 = arith.truncf %1 : vector<32x121xf32> to vector<32x121xbf16>
    %c0_2 = arith.constant 0 : index
    %c0_3 = arith.constant 0 : index
    %3 = vector.load %arg2[%c0_2, %c0_3] : memref<16x32xbf16, #tpu.memory_space<vmem>>, vector<16x32xbf16>
    %cst = arith.constant dense<0.000000e+00> : vector<16x121xf32>
    %4 = tpu.matmul %3, %2, %cst {dimension_numbers = #tpu.dot_dimension_numbers<[1], [0], [0], [1], [0, 0, 1, 1], [], []>} : vector<16x32xbf16>, vector<32x121xbf16>, vector<16x121xf32> -> vector<16x121xf32>
    %c0_4 = arith.constant 0 : index
    %c0_5 = arith.constant 0 : index
    %5 = vector.load %arg3[%c0_4, %c0_5] : memref<16x1xf32, #tpu.memory_space<vmem>>, vector<16x1xf32>
    %6 = vector.broadcast %5 : vector<16x1xf32> to vector<16x121xf32>
    %7 = arith.addf %4, %6 : vector<16x121xf32>
    %cst_6 = arith.constant 0.000000e+00 : f32
    %8 = vector.broadcast %cst_6 : f32 to vector<16x121xf32>
    %9 = arith.maximumf %7, %8 : vector<16x121xf32>
    %c0_7 = arith.constant 0 : index
    %c0_8 = arith.constant 0 : index
    %10 = vector.load %arg4[%c0_7, %c0_8] : memref<16x1xf32, #tpu.memory_space<vmem>>, vector<16x1xf32>
    %11 = vector.broadcast %10 : vector<16x1xf32> to vector<16x121xf32>
    %12 = arith.mulf %9, %11 : vector<16x121xf32>
    %cst_9 = arith.constant dense<0.000000e+00> : vector<121xf32>
    %13 = vector.multi_reduction <add>, %12, %cst_9 [0] : vector<16x121xf32> to vector<121xf32>
    %14 = vector.shape_cast %13 : vector<121xf32> to vector<1x121xf32>
    %c0_10 = arith.constant 0 : index
    %c0_11 = arith.constant 0 : index
    %15 = vector.load %arg5[%c0_10, %c0_11] : memref<1x1xf32, #tpu.memory_space<vmem>>, vector<1x1xf32>
    %16 = vector.broadcast %15 : vector<1x1xf32> to vector<1x121xf32>
    %17 = arith.addf %14, %16 : vector<1x121xf32>
    %18 = arith.negf %17 : vector<1x121xf32>
    %19 = math.exp %18 : vector<1x121xf32>
    %cst_12 = arith.constant 1.000000e+00 : f32
    %20 = vector.broadcast %cst_12 : f32 to vector<1x121xf32>
    %21 = arith.addf %20, %19 : vector<1x121xf32>
    %22 = arith.divf %20, %21 : vector<1x121xf32>
    %c0_13 = arith.constant 0 : index
    %c0_14 = arith.constant 0 : index
    %c0_15 = arith.constant 0 : index
    %23 = vector.load %arg6[%c0_13, %c0_14, %c0_15] : memref<1x1x121xf32, #tpu.memory_space<vmem>>, vector<1x1x121xf32>
    %24 = vector.shape_cast %23 : vector<1x1x121xf32> to vector<1x121xf32>
    %25 = vector.shape_cast %22 : vector<1x121xf32> to vector<1x1x121xf32>
    tpu.vector_store %arg6[%c0_13, %c0_14, %c0_15], %25 {strides = array<i32>} : memref<1x1x121xf32, #tpu.memory_space<vmem>>, vector<1x1x121xf32>,
    return
  }
  func.func @transform_0(%arg0: i32) -> (i32, i32, i32) {
    %c0_i32 = arith.constant 0 : i32
    %c0_i32_0 = arith.constant 0 : i32
    %c0_i32_1 = arith.constant 0 : i32
    return %arg0, %c0_i32, %c0_i32_0 : i32, i32, i32
  }
  func.func @transform_1(%arg0: i32) -> (i32, i32) {
    %c0_i32 = arith.constant 0 : i32
    %c0_i32_0 = arith.constant 0 : i32
    %c0_i32_1 = arith.constant 0 : i32
    return %c0_i32, %c0_i32_0 : i32, i32
  }
  func.func @transform_2(%arg0: i32) -> (i32, i32) {
    %c0_i32 = arith.constant 0 : i32
    %c0_i32_0 = arith.constant 0 : i32
    %c0_i32_1 = arith.constant 0 : i32
    return %c0_i32, %c0_i32_0 : i32, i32
  }
  func.func @transform_3(%arg0: i32) -> (i32, i32) {
    %c0_i32 = arith.constant 0 : i32
    %c0_i32_0 = arith.constant 0 : i32
    %c0_i32_1 = arith.constant 0 : i32
    return %c0_i32, %c0_i32_0 : i32, i32
  }
  func.func @transform_4(%arg0: i32) -> (i32, i32) {
    %c0_i32 = arith.constant 0 : i32
    %c0_i32_0 = arith.constant 0 : i32
    %c0_i32_1 = arith.constant 0 : i32
    return %c0_i32, %c0_i32_0 : i32, i32
  }
  func.func @transform_5(%arg0: i32) -> (i32, i32, i32) {
    %c0_i32 = arith.constant 0 : i32
    %c0_i32_0 = arith.constant 0 : i32
    %c0_i32_1 = arith.constant 0 : i32
    return %arg0, %c0_i32, %c0_i32_0 : i32, i32, i32
  }
}

</mosaic_0001>

<llo_original>
// kernel: tpu_custom_call.1
$region0: #{tpu_custom_call.1}
  #allocation0 [shape = 'u32[]', space=smem, size = 0x4, offset = 0x4, fixed_abs, tag = 'smem constant byte address 0x4 - core index']
  #allocation1 [shape = 'u32[144,128]{1,0:T(1,128)}', space=vmem, size = 0x12000, scoped, tag = 'internal scratch']
  #allocation2 [shape = 'f32[1,1]{1,0:T(1,128)S(1)}', space=vmem, size = 0x200, scoped, tag = 'scoped memory for tpu_custom_call.1']
  %s0 = inlined_call_operand.hbm [shape: f32[2,32,121], index: 0, kind: input, shape index: {}]
  %s1 = inlined_call_operand.vmem [shape: bf16[16,32], index: 1, kind: input, shape index: {}]
  %s2 = inlined_call_operand.vmem [shape: f32[16,1], index: 2, kind: input, shape index: {}]
  %s3 = inlined_call_operand.vmem [shape: f32[16,1], index: 3, kind: input, shape index: {}]
  %s4 = inlined_call_operand.<no memory space> [shape: f32[1,1], index: 4, kind: input, shape index: {}]
  %s5 = inlined_call_operand.hbm [shape: f32[2,1,121], index: 5, kind: output, shape index: {}]
  %s6 = sld [smem:[#allocation0]]
  $region57: #{tpu_custom_call.1} parent=0
    _
  %s8 = ssub.s32 1, %s6
  %s9 = scalar_select 0, %s8, %s6
  %v10 = vstv %s4
  %11 = vst [vmem:[#allocation2] sm:$0x1] %v10
  $region1: #{tpu_custom_call.1} parent=0
    #allocation3 [shape = 'u8[32768]{0}', space=vmem, size = 0x8000, scoped, tag = 'input window, operand 0']
    #allocation4 [shape = 's32[2]{0}', space=sflag, size = 0x8, scoped, tag = 'scoped memory for tpu_custom_call.1']
    #allocation5 [shape = 's32[2]{0}', space=sflag, size = 0x8, scoped, tag = 'scoped memory for tpu_custom_call.1']
    #allocation6 [shape = 'u8[1024]{0}', space=vmem, size = 0x400, scoped, tag = 'output window, operand 0']
    %12 = vsyncpa [#allocation4], 0
    %s13 = scalar_lea.sflag [#allocation4], 1
    %14 = vsyncpa %s13, 0
    %15 = vsyncpa [#allocation5], 0
    %s16 = scalar_lea.sflag [#allocation5], 1
    %17 = vsyncpa %s16, 0
    loop: start=0, step=1, limit=4
    $region2: #{tpu_custom_call.1} parent=1 // loop_pre_header
      _
    $region3: #{tpu_custom_call.1} parent=1 // loop_header
      %s19 = sphi 0, %s23
      %p20 = scmp.ge.s32.totalorder %s19, 4
      %s29 = sphi 0, %s31
      %s32 = sphi 0, %s29
      %s33 = sphi 0, %s32
      %s49 = sphi 0, %s33
      %s53 = sphi 0, %s53
      %s55 = sphi 0, %s53
      %s56 = sphi 0, %s55
      %s70 = sphi 0, %s56
      %s74 = sphi 0, %s74
      %s76 = sphi 0, %s74
      %s77 = sphi 0, %s76
      %s91 = sphi 0, %s77
      %s95 = sphi 0, %s95
      %s97 = sphi 0, %s95
      %s98 = sphi 0, %s97
      %s112 = sphi 0, %s98
      %s116 = sphi 0, %s116
      %s118 = sphi 0, %s116
      %s119 = sphi 0, %s118
      %s133 = sphi 0, %s119
      %s139 = sphi 0, %s141
      %s142 = sphi 0, %s139
      %s143 = sphi 0, %s142
      %s159 = sphi 0, %s143
    $region4: #{tpu_custom_call.1} parent=1 // loop_header_branch
      %22 = sbr.rel (%p20) target = $region8
    $region5: #{tpu_custom_call.1} parent=1 // loop_body
      %s24 = ssub.s32 %s19, 1
      %s25 = ssub.s32 %s19, 2
      %s26 = sadd.s32 %s19, 1
      %s27 = ssub.s32 %s19, %s26
      %p28 = scmp.eq.s32.totalorder %s27, 0
      %s30 = sadd.s32 %s29, 1
      %s31 = scalar_select %p28, %s29, %s30
      %p34 = pneg %p28
      %p35 = scmp.eq.s32.totalorder %s19, 1
      %p36 = por %p34, %p35
      %p37 = scmp.ne.s32.totalorder %s29, %s32
      %p38 = scmp.eq.s32.totalorder %s19, 0
      %p39 = por %p37, %p38
      %p40 = scmp.ne.s32.totalorder %s29, %s32
      %p41 = scmp.eq.s32.totalorder %s24, 1
      %p42 = por %p40, %p41
      %p43 = scmp.ne.s32.totalorder %s32, %s33
      %p44 = scmp.eq.s32.totalorder %s24, 0
      %p45 = por %p43, %p44
      %p46 = scmp.ne.s32.totalorder %s32, %s33
      %p47 = scmp.eq.s32.totalorder %s25, 1
      %p48 = por %p46, %p47
      %p50 = scmp.ne.s32.totalorder %s33, %s49
      %p51 = scmp.eq.s32.totalorder %s25, 0
      %p52 = por %p50, %p51
      %s54 = sadd.s32 %s53, 1
      %p57 = scmp.eq.s32.totalorder %s19, 1
      %p58 = scmp.ne.s32.totalorder %s53, %s55
      %p59 = scmp.eq.s32.totalorder %s19, 0
      %p60 = por %p58, %p59
      %p61 = scmp.ne.s32.totalorder %s53, %s55
      %p62 = scmp.eq.s32.totalorder %s24, 1
      %p63 = por %p61, %p62
      %p64 = scmp.ne.s32.totalorder %s55, %s56
      %p65 = scmp.eq.s32.totalorder %s24, 0
      %p66 = por %p64, %p65
      %p67 = scmp.ne.s32.totalorder %s55, %s56
      %p68 = scmp.eq.s32.totalorder %s25, 1
      %p69 = por %p67, %p68
      %p71 = scmp.ne.s32.totalorder %s56, %s70
      %p72 = scmp.eq.s32.totalorder %s25, 0
      %p73 = por %p71, %p72
      %s75 = sadd.s32 %s74, 1
      %p78 = scmp.eq.s32.totalorder %s19, 1
      %p79 = scmp.ne.s32.totalorder %s74, %s76
      %p80 = scmp.eq.s32.totalorder %s19, 0
      %p81 = por %p79, %p80
      %p82 = scmp.ne.s32.totalorder %s74, %s76
      %p83 = scmp.eq.s32.totalorder %s24, 1
      %p84 = por %p82, %p83
      %p85 = scmp.ne.s32.totalorder %s76, %s77
      %p86 = scmp.eq.s32.totalorder %s24, 0
      %p87 = por %p85, %p86
      %p88 = scmp.ne.s32.totalorder %s76, %s77
      %p89 = scmp.eq.s32.totalorder %s25, 1
      %p90 = por %p88, %p89
      %p92 = scmp.ne.s32.totalorder %s77, %s91
      %p93 = scmp.eq.s32.totalorder %s25, 0
      %p94 = por %p92, %p93
      %s96 = sadd.s32 %s95, 1
      %p99 = scmp.eq.s32.totalorder %s19, 1
      %p100 = scmp.ne.s32.totalorder %s95, %s97
      %p101 = scmp.eq.s32.totalorder %s19, 0
      %p102 = por %p100, %p101
      %p103 = scmp.ne.s32.totalorder %s95, %s97
      %p104 = scmp.eq.s32.totalorder %s24, 1
      %p105 = por %p103, %p104
      %p106 = scmp.ne.s32.totalorder %s97, %s98
      %p107 = scmp.eq.s32.totalorder %s24, 0
      %p108 = por %p106, %p107
      %p109 = scmp.ne.s32.totalorder %s97, %s98
      %p110 = scmp.eq.s32.totalorder %s25, 1
      %p111 = por %p109, %p110
      %p113 = scmp.ne.s32.totalorder %s98, %s112
      %p114 = scmp.eq.s32.totalorder %s25, 0
      %p115 = por %p113, %p114
      %s117 = sadd.s32 %s116, 1
      %p120 = scmp.eq.s32.totalorder %s19, 1
      %p121 = scmp.ne.s32.totalorder %s116, %s118
      %p122 = scmp.eq.s32.totalorder %s19, 0
      %p123 = por %p121, %p122
      %p124 = scmp.ne.s32.totalorder %s116, %s118
      %p125 = scmp.eq.s32.totalorder %s24, 1
      %p126 = por %p124, %p125
      %p127 = scmp.ne.s32.totalorder %s118, %s119
      %p128 = scmp.eq.s32.totalorder %s24, 0
      %p129 = por %p127, %p128
      %p130 = scmp.ne.s32.totalorder %s118, %s119
      %p131 = scmp.eq.s32.totalorder %s25, 1
      %p132 = por %p130, %p131
      %p134 = scmp.ne.s32.totalorder %s119, %s133
      %p135 = scmp.eq.s32.totalorder %s25, 0
      %p136 = por %p134, %p135
      %s137 = ssub.s32 %s19, %s26
      %p138 = scmp.eq.s32.totalorder %s137, 0
      %s140 = sadd.s32 %s139, 1
      %s141 = scalar_select %p138, %s139, %s140
      %p144 = pneg %p138
      %p145 = scmp.eq.s32.totalorder %s19, 1
      %p146 = por %p144, %p145
      %p147 = scmp.ne.s32.totalorder %s139, %s142
      %p148 = scmp.eq.s32.totalorder %s19, 0
      %p149 = por %p147, %p148
      %p150 = scmp.ne.s32.totalorder %s139, %s142
      %p151 = scmp.eq.s32.totalorder %s24, 1
      %p152 = por %p150, %p151
      %p153 = scmp.ne.s32.totalorder %s142, %s143
      %p154 = scmp.eq.s32.totalorder %s24, 0
      %p155 = por %p153, %p154
      %p156 = scmp.ne.s32.totalorder %s142, %s143
      %p157 = scmp.eq.s32.totalorder %s25, 1
      %p158 = por %p156, %p157
      %p160 = scmp.ne.s32.totalorder %s143, %s159
      %p161 = scmp.eq.s32.totalorder %s25, 0
      %p162 = por %p160, %p161
      %p163 = scmp.le.s32.totalorder 1, %s19
      %p164 = scmp.lt.s32.totalorder %s19, 3
      %p165 = pnand %p163, %p164
      %p166 = pneg %p165
      // Predicated region
      $region9: #{tpu_custom_call.1} parent=5 // pred_check
        _
      $region10: #{tpu_custom_call.1} parent=5 // pred_check_branch
        %168 = sbr.rel (%p165) target = $region12
      $region11: #{tpu_custom_call.1} parent=5 // pred_region
        %s169 = ssub.s32 %s19, 1
        // Predicated region
        $region13: #{tpu_custom_call.1} parent=11 // pred_check
          %p170 = pneg %p66
        $region14: #{tpu_custom_call.1} parent=11 // pred_check_branch
          %172 = sbr.rel (%p170) target = $region16
        $region15: #{tpu_custom_call.1} parent=11 // pred_region
          _
        $region16: #{tpu_custom_call.1} parent=11 // pred_fallthru
          _
        // Predicated region
        $region17: #{tpu_custom_call.1} parent=11 // pred_check
          %p173 = pneg %p87
        $region18: #{tpu_custom_call.1} parent=11 // pred_check_branch
          %175 = sbr.rel (%p173) target = $region20
        $region19: #{tpu_custom_call.1} parent=11 // pred_region
          _
        $region20: #{tpu_custom_call.1} parent=11 // pred_fallthru
          _
        // Predicated region
        $region21: #{tpu_custom_call.1} parent=11 // pred_check
          %p176 = pneg %p108
        $region22: #{tpu_custom_call.1} parent=11 // pred_check_branch
          %178 = sbr.rel (%p176) target = $region24
        $region23: #{tpu_custom_call.1} parent=11 // pred_region
          _
        $region24: #{tpu_custom_call.1} parent=11 // pred_fallthru
          _
        // Predicated region
        $region25: #{tpu_custom_call.1} parent=11 // pred_check
          %p179 = pneg %p129
        $region26: #{tpu_custom_call.1} parent=11 // pred_check_branch
          %181 = sbr.rel (%p179) target = $region28
        $region27: #{tpu_custom_call.1} parent=11 // pred_region
          _
        $region28: #{tpu_custom_call.1} parent=11 // pred_fallthru
          _
      $region12: #{tpu_custom_call.1} parent=5 // pred_fallthru
        _
      %p182 = scmp.lt.s32.totalorder %s19, 2
      // Predicated region
      $region29: #{tpu_custom_call.1} parent=5 // pred_check
        %p183 = pneg %p182
      $region30: #{tpu_custom_call.1} parent=5 // pred_check_branch
        %185 = sbr.rel (%p183) target = $region32
      $region31: #{tpu_custom_call.1} parent=5 // pred_region
        // Predicated region
        $region33: #{tpu_custom_call.1} parent=31 // pred_check
          %p186 = pneg %p39
        $region34: #{tpu_custom_call.1} parent=31 // pred_check_branch
          %188 = sbr.rel (%p186) target = $region36
        $region35: #{tpu_custom_call.1} parent=31 // pred_region
          %s189 = sand.u32 %s29, 1
          %s190 = scalar_lea.sflag [#allocation4], %s189
          %s191 = sand.u32 %s29, 1
          %s192 = smul.addr %s191, 32
          %s193 = scalar_lea.vmem [#allocation3], %s192
          %s195 = ssub.s32 512, 512
          %196 = vsyncadd %s190, %s195
          %s197 = smul.addr %s19, 4
          %s198 = smul.addr %s197, 128
          %s199 = scalar_lea.hbm %s0, %s198
          %s200 = sshll.u32 %s193, 4
          %s201 = int_to_ptr.vmem [resolvable:$true] %s200
          %206 = dma.hbm_to_vmem [thread:$0]  %s199, 512, %s201, %s190, 128, 128, 8
        $region36: #{tpu_custom_call.1} parent=31 // pred_fallthru
          _
      $region32: #{tpu_custom_call.1} parent=5 // pred_fallthru
        _
      %p207 = scmp.le.s32.totalorder 1, %s19
      %p208 = scmp.lt.s32.totalorder %s19, 3
      %p209 = pnand %p207, %p208
      %p210 = pneg %p209
      // Predicated region
      $region37: #{tpu_custom_call.1} parent=5 // pred_check
        _
      $region38: #{tpu_custom_call.1} parent=5 // pred_check_branch
        %212 = sbr.rel (%p209) target = $region40
      $region39: #{tpu_custom_call.1} parent=5 // pred_region
        %s213 = ssub.s32 %s19, 1
        %s214 = sand.u32 %s32, 1
        %s215 = scalar_lea.sflag [#allocation4], %s214
        %s216 = sand.u32 %s32, 1
        %s217 = smul.addr %s216, 32
        %s218 = scalar_lea.vmem [#allocation3], %s217
        // Predicated region
        $region41: #{tpu_custom_call.1} parent=39 // pred_check
          %p219 = pneg %p45
        $region42: #{tpu_custom_call.1} parent=39 // pred_check_branch
          %221 = sbr.rel (%p219) target = $region44
        $region43: #{tpu_custom_call.1} parent=39 // pred_region
          %222 = dma.done %s215, 512
        $region44: #{tpu_custom_call.1} parent=39 // pred_fallthru
          _
        %s223 = sand.u32 %s32, 1
        %s224 = scalar_lea.sflag [#allocation4], %s223
        %s225 = sand.u32 %s32, 1
        %s226 = smul.addr %s225, 32
        %s227 = scalar_lea.vmem [#allocation3], %s226
        %p228 = pneg %p45
        %p229 = pneg %p42
        %p230 = pneg %p66
        %p231 = pneg %p63
        %p232 = pneg %p87
        %p233 = pneg %p84
        %p234 = pneg %p108
        %p235 = pneg %p105
        %p236 = pneg %p129
        %p237 = pneg %p126
        %p238 = pneg %p155
        %p239 = pneg %p152
        %s240 = sand.u32 %s142, 1
        %s241 = scalar_lea.sflag [#allocation5], %s240
        %s242 = sand.u32 %s142, 1
        %s243 = scalar_lea.vmem [#allocation6], %s242
        %v245 = vld [vmem:[%s218] sm:$0xff]
        %v246 = vld [vmem:[%s218 + $0x8] sm:$0xff]
        %v247 = vld [vmem:[%s218 + $0x10] sm:$0xff]
        %v248 = vld [vmem:[%s218 + $0x18] sm:$0xff]
        %v249 = vpack.c.bf16 %v246, %v245
        %v250 = vpack.c.bf16 %v248, %v247
        %v251 = vld [vmem:[%s1] sm:$0xf]
        %v252 = vld [vmem:[%s1 + $0x4] sm:$0xf]
        %v253 = vld [vmem:[%s2] sm:$0xff]
        %v254 = vld [vmem:[%s2 + $0x8] sm:$0xff]
        %256 = vset.pattern.permute.xlu0 0
        %257 = vperm.xlu0 %256, %v253
        %v258 = vpop.permute.xlu0 %257
        %261 = vset.pattern.permute.xlu0 0
        %262 = vperm.xlu0 %261, %v254
        %v263 = vpop.permute.xlu0 %262
        %v267 = vunpack.c.l.b16 %v251
        %v268 = vunpack.c.l.b16 %v252
        %v269 = vpack.c.b16 %v268, %v267
        %vm270 = vcmask 261120
        %v272 = vsel %vm270, %v269, 0
        %274 = vmatprep.subr.bf16.mxu0 0
        %275 = vmatpush1.bf16.msra.mxu0 %v249
        %276 = vmatprep.subr.bf16.mxu0 0
        %277 = vmatpush1.bf16.msra.mxu0 %v250
        %278 = vmatprep.subr.bf16.mxu0 0
        %279 = vmatpush1.bf16.msra.mxu0 0
        %280 = vmatprep.subr.bf16.mxu0 0
        %281 = vmatpush1.bf16.msra.mxu0 0
        %282 = vmatprep.subr.bf16.mxu0 0
        %283 = vmatpush1.bf16.msra.mxu0 0
        %284 = vmatprep.subr.bf16.mxu0 0
        %285 = vmatpush1.bf16.msra.mxu0 0
        %286 = vmatprep.subr.bf16.mxu0 0
        %287 = vmatpush1.bf16.msra.mxu0 0
        %288 = vmatprep.subr.bf16.mxu0 0
        %289 = vmatpush1.bf16.msra.mxu0 0
        %290 = vmatprep.subr.bf16.mxu0 0
        %291 = vmatpush1.bf16.msra.mxu0 0
        %292 = vmatprep.subr.bf16.mxu0 0
        %293 = vmatpush1.bf16.msra.mxu0 0
        %294 = vmatprep.subr.bf16.mxu0 0
        %295 = vmatpush1.bf16.msra.mxu0 0
        %296 = vmatprep.subr.bf16.mxu0 0
        %297 = vmatpush1.bf16.msra.mxu0 0
        %298 = vmatprep.subr.bf16.mxu0 0
        %299 = vmatpush1.bf16.msra.mxu0 0
        %300 = vmatprep.subr.bf16.mxu0 0
        %301 = vmatpush1.bf16.msra.mxu0 0
        %302 = vmatprep.subr.bf16.mxu0 0
        %303 = vmatpush1.bf16.msra.mxu0 0
        %304 = vmatprep.subr.bf16.mxu0 0
        %305 = vmatpush1.bf16.msra.mxu0 0
        %306 = vmatprep.mubr.bf16.mxu0 0
        %307 = vmatmul.mubr.bf16.gmra.mrb[0].mxu0 %v272
        %v308 = vpop.f32.mrb[0].mxu0
        %v309 = vadd.f32 %v258, %v308
        %v310 = vpop.f32.mrb[0].mxu0
        %v311 = vpop.f32.mrb[0].mxu0
        %v312 = vadd.f32 %v263, %v311
        %v313 = vpop.f32.mrb[0].mxu0
        %314 = vdwg.mxu0
        %v315 = vmax.f32 %v309, 0.0
        %v316 = vmax.f32 %v312, 0.0
        %v317 = vld [vmem:[%s3] sm:$0xff]
        %v318 = vld [vmem:[%s3 + $0x8] sm:$0xff]
        %320 = vset.pattern.permute.xlu0 0
        %321 = vperm.xlu0 %320, %v317
        %v322 = vpop.permute.xlu0 %321
        %325 = vset.pattern.permute.xlu0 0
        %326 = vperm.xlu0 %325, %v318
        %v327 = vpop.permute.xlu0 %326
        %v329 = vmul.f32 %v315, %v322
        %v330 = vmul.f32 %v316, %v327
        %vm331 = vcmask 990208
        %v332 = vsel %vm331, %v329, 0.0
        %v333 = vsel %vm331, %v330, 0.0
        %v334 = vadd.f32 %v332, %v333
        %v335 = vrot.slane %v334, 4
        %v336 = vadd.f32 %v334, %v335
        %v337 = vrot.slane %v336, 2
        %v338 = vadd.f32 %v336, %v337
        %v339 = vrot.slane %v338, 1
        %v340 = vadd.f32 %v338, %v339
        %v341 = vld [vmem:[#allocation2] sm:$0x1]
        %343 = vset.pattern.permute.xlu0 0
        %344 = vperm.xlu0 %343, %v341
        %v345 = vpop.permute.xlu0 %344
        %v347 = vlaneseq
        %v348 = vshrl.u32 %v347, 7
        %v349 = vsub.s32 0, %v348
        %v350 = vrot.slane %v345, %v349
        %v351 = vadd.f32 %v340, %v350
        %v352 = vxor.u32 %v351, 2147483648
        %v353 = vmul.f32 %v352, 1.442695
        %v354 = vpow.pop %v353
        %v355 = vadd.f32 %v354, 1.0
        %v356 = vrcp.pop %v355
        %v357 = vmul.f32 1.0, %v356
        %vm358 = vcmask 983040
        %359 = vst.msk [vmem:[%s243] sm:$0x1] %vm358, %v357
        %s360 = sand.u32 %s142, 1
        %s361 = scalar_lea.sflag [#allocation5], %s360
        %s362 = sand.u32 %s142, 1
        %s363 = scalar_lea.vmem [#allocation6], %s362
        // Predicated region
        $region45: #{tpu_custom_call.1} parent=39 // pred_check
          %p364 = pneg %p152
        $region46: #{tpu_custom_call.1} parent=39 // pred_check_branch
          %366 = sbr.rel (%p364) target = $region48
        $region47: #{tpu_custom_call.1} parent=39 // pred_region
          %s368 = ssub.s32 16, 16
          %369 = vsyncadd %s361, %s368
          %s370 = smul.addr %s24, 16
          %s371 = scalar_lea.hbm %s5, %s370
          %s373 = sshll.u32 %s363, 4
          %s374 = int_to_ptr.vmem [resolvable:$true] %s373
          %376 = dma.vmem_to_hbm [thread:$0]  %s374, 16, %s371, %s361
        $region48: #{tpu_custom_call.1} parent=39 // pred_fallthru
          _
      $region40: #{tpu_custom_call.1} parent=5 // pred_fallthru
        _
      %p377 = scmp.le.s32.totalorder 2, %s19
      // Predicated region
      $region49: #{tpu_custom_call.1} parent=5 // pred_check
        %p378 = pneg %p377
      $region50: #{tpu_custom_call.1} parent=5 // pred_check_branch
        %380 = sbr.rel (%p378) target = $region52
      $region51: #{tpu_custom_call.1} parent=5 // pred_region
        %s381 = ssub.s32 %s19, 2
        // Predicated region
        $region53: #{tpu_custom_call.1} parent=51 // pred_check
          %p382 = pneg %p158
        $region54: #{tpu_custom_call.1} parent=51 // pred_check_branch
          %384 = sbr.rel (%p382) target = $region56
        $region55: #{tpu_custom_call.1} parent=51 // pred_region
          %s385 = sand.u32 %s143, 1
          %s386 = scalar_lea.sflag [#allocation5], %s385
          %s387 = sand.u32 %s143, 1
          %s388 = scalar_lea.vmem [#allocation6], %s387
          %389 = dma.done %s386, 16
        $region56: #{tpu_custom_call.1} parent=51 // pred_fallthru
          _
      $region52: #{tpu_custom_call.1} parent=5 // pred_fallthru
        _
    $region6: #{tpu_custom_call.1} parent=1 // loop_footer
      %s23 = sadd.s32 1, %s19
    $region7: #{tpu_custom_call.1} parent=1 // loop_footer_branch
      %18 = sbr.rel target = $region3
    $region8: #{tpu_custom_call.1} parent=1 // loop_exit
      _
    %390 = vsyncpa [#allocation4], 1
    %s391 = scalar_lea.sflag [#allocation4], 1
    %392 = vsyncpa %s391, 1
    %393 = vsyncpa [#allocation5], 1
    %s394 = scalar_lea.sflag [#allocation5], 1
    %395 = vsyncpa %s394, 1

</llo_original>
